<compile_context>
chip_gen: v6e
topology: v6e:2x2x1
jax: 0.10.0
libtpu: 0.0.40
codegen_flags: <defaults>
</compile_context>

<pallas_src>
import functools
import math

import jax
import jax.numpy as jnp
import numpy as np
from jax.experimental import pallas as pl
from jax.experimental.pallas import tpu as pltpu

_LN5 = math.log(5.0)


def _custom_loss3_kernel(
    pred_c_ref, obs_c_ref, pred_v_ref, media_ref, vazao_ref, wc_ref, wv_ref,
    loss_ref, nse_ref,
    acc_sc, acc_dc, acc_sv, acc_cc, acc_cv,
    *, n_valid, tb):
    i = pl.program_id(0)
    n_steps = pl.num_programs(0)

    @pl.when(i == 0)
    def _init():
        acc_sc[...] = jnp.zeros_like(acc_sc)
        acc_dc[...] = jnp.zeros_like(acc_dc)
        acc_sv[...] = jnp.zeros_like(acc_sv)
        acc_cc[...] = jnp.zeros_like(acc_cc)
        acc_cv[...] = jnp.zeros_like(acc_cv)

    # Lane-validity mask for the padded batch tail (robust to any pad values).
    lane = jax.lax.broadcasted_iota(jnp.int32, (1, tb), 1)
    valid = (i * tb + lane) < n_valid                       # (1, tb) bool

    pc = pred_c_ref[...]                                     # (Tc, tb)
    oc = obs_c_ref[...]                                      # (Tc, tb)
    pv = pred_v_ref[...]                                     # (Tv, tb)
    med = media_ref[...]                                     # (Tc, 1)
    vz = vazao_ref[...]                                      # (Tv, 1)

    d_po = pc - oc
    sq_po = jnp.where(valid, d_po * d_po, 0.0)               # rmse_cota AND nse numerator
    d_om = oc - med
    sq_om = jnp.where(valid, d_om * d_om, 0.0)               # nse denominator
    d_vv = pv - vz
    sq_vv = jnp.where(valid, d_vv * d_vv, 0.0)               # rmse_vazao
    neg_c = jnp.where(jnp.logical_and(valid, pc < 0.0), 1.0, 0.0)
    neg_v = jnp.where(jnp.logical_and(valid, pv < 0.0), 1.0, 0.0)

    # Fold TB lanes into the 128-wide per-lane accumulators (pure VPU adds;
    # no per-tile XLU reductions).
    for g in range(tb // 128):
        sl = slice(g * 128, (g + 1) * 128)
        acc_sc[...] += sq_po[:, sl]
        acc_dc[...] += sq_om[:, sl]
        acc_sv[...] += sq_vv[:, sl]
        acc_cc[...] += neg_c[:, sl]
        acc_cv[...] += neg_v[:, sl]

    @pl.when(i == n_steps - 1)
    def _finalize():
        inv_b = jnp.float32(1.0 / n_valid)
        # One cross-lane (XLU) pass over the tiny accumulators.
        s_c = jnp.sum(acc_sc[...], axis=1, keepdims=True)    # (Tc, 1)
        d_c = jnp.sum(acc_dc[...], axis=1, keepdims=True)    # (Tc, 1)
        s_v = jnp.sum(acc_sv[...], axis=1, keepdims=True)    # (Tv, 1)
        cnt = jnp.sum(acc_cc[...]) + jnp.sum(acc_cv[...])    # scalar count of neg preds

        rmse_c = jnp.sqrt(s_c * inv_b)                       # per-day RMSE cota
        rmse_v = jnp.sqrt(s_v * inv_b)                       # per-day RMSE vazao
        wc = wc_ref[...]
        wv = wv_ref[...]
        rmse_c_w = jnp.sum(rmse_c * wc) / jnp.sum(wc)
        rmse_v_w = jnp.sum(rmse_v * wv) / jnp.sum(wv)

        nse = 1.0 - s_c / (d_c + 1e-8)                       # (Tc, 1)
        nse_mean = jnp.mean(nse)

        # 5 ** count via exp on the EUP (exact division kept for NSE to stay
        # within reference tolerance; it runs once in the finalize).
        penalty = jnp.exp(cnt * jnp.float32(_LN5))
        loss = penalty + rmse_c_w + rmse_v_w / 25.0

        loss_ref[...] = jnp.broadcast_to(loss, (1, 1)).astype(loss_ref.dtype)
        nse_ref[...] = jnp.broadcast_to(nse_mean, (1, 1)).astype(nse_ref.dtype)


def custom_loss3(pred_cota, obs_cota, pred_vazao, vazao, media, *, tb=128):
    """Pallas TPU implementation of CustomLoss3.forward.

    Returns (loss, nse_cota_mean); `loss` matches the module's returned
    sum_erro, `nse_cota_mean` matches erros['NSE COTA'].
    """
    assert tb % 128 == 0, "batch tile must be a multiple of 128 lanes"
    pred_cota = jnp.asarray(pred_cota, jnp.float32)
    obs_cota = jnp.asarray(obs_cota, jnp.float32)
    pred_vazao = jnp.asarray(pred_vazao, jnp.float32)
    B, tc = pred_cota.shape
    _, tv = pred_vazao.shape

    n_tiles = pl.cdiv(B, tb)
    bpad = n_tiles * tb

    def t_pad(x):                       # (B, T) -> lane-dense (T, Bpad)
        x = x.T
        pad = bpad - x.shape[1]
        return jnp.pad(x, ((0, 0), (0, pad))) if pad else x

    pred_c_t = t_pad(pred_cota)
    obs_c_t = t_pad(obs_cota)
    pred_v_t = t_pad(pred_vazao)

    media_c = jnp.asarray(media, jnp.float32).reshape(tc, 1)
    vazao_c = jnp.asarray(vazao, jnp.float32).reshape(tv, 1)
    # Module hardcodes pesos_cota=[2,1,...,1,2] and pesos_vazao=ones.
    pesos_cota = (jnp.ones((tc,), jnp.float32)
                  .at[0].set(2.0).at[tc - 1].set(2.0).reshape(tc, 1))
    pesos_vazao = jnp.ones((tv, 1), jnp.float32)

    kernel = functools.partial(_custom_loss3_kernel, n_valid=int(B), tb=int(tb))
    loss, nse = pl.pallas_call(
        kernel,
        out_shape=(jax.ShapeDtypeStruct((1, 1), jnp.float32),
                   jax.ShapeDtypeStruct((1, 1), jnp.float32)),
        grid=(n_tiles,),
        in_specs=[
            pl.BlockSpec((tc, tb), lambda i: (0, i)),   # pred cota   (lane-dense)
            pl.BlockSpec((tc, tb), lambda i: (0, i)),   # obs cota
            pl.BlockSpec((tv, tb), lambda i: (0, i)),   # pred vazao
            pl.BlockSpec((tc, 1), lambda i: (0, 0)),    # media      (resident)
            pl.BlockSpec((tv, 1), lambda i: (0, 0)),    # vazao      (resident)
            pl.BlockSpec((tc, 1), lambda i: (0, 0)),    # pesos cota
            pl.BlockSpec((tv, 1), lambda i: (0, 0)),    # pesos vazao
        ],
        out_specs=(pl.BlockSpec((1, 1), lambda i: (0, 0)),
                   pl.BlockSpec((1, 1), lambda i: (0, 0))),
        scratch_shapes=[
            pltpu.VMEM((tc, 128), jnp.float32),   # sum (pred_c - obs_c)^2
            pltpu.VMEM((tc, 128), jnp.float32),   # sum (obs_c - media)^2
            pltpu.VMEM((tv, 128), jnp.float32),   # sum (pred_v - vazao)^2
            pltpu.VMEM((tc, 128), jnp.float32),   # count pred_c < 0
            pltpu.VMEM((tv, 128), jnp.float32),   # count pred_v < 0
        ],
        compiler_params=pltpu.CompilerParams(
            dimension_semantics=("arbitrary",)),  # accumulation across batch tiles
    )(pred_c_t, obs_c_t, pred_v_t, media_c, vazao_c, pesos_cota, pesos_vazao)
    return loss[0, 0], nse[0, 0]


def _reference_forward(pred_cota, obs_cota, pred_vazao, vazao, media):
    """Pure-JAX reference matching CustomLoss3.forward semantics."""
    tc = pred_cota.shape[1]
    tv = pred_vazao.shape[1]
    pesos_cota = jnp.ones((tc,), jnp.float32).at[0].set(2.0).at[tc - 1].set(2.0)
    pesos_vazao = jnp.ones((tv,), jnp.float32)
    count = (jnp.sum(pred_cota < 0) + jnp.sum(pred_vazao < 0)).astype(jnp.float32)
    sum_erro = jnp.float32(5.0) ** count
    rmse_cota = jnp.sqrt(jnp.mean(jnp.abs(pred_cota - obs_cota) ** 2, axis=0))
    rmse_vazao = jnp.sqrt(jnp.mean(jnp.abs(pred_vazao - vazao[None, :]) ** 2, axis=0))
    numerator = jnp.sum((obs_cota - pred_cota) ** 2, axis=0)
    denominator = jnp.sum((obs_cota - media[None, :]) ** 2, axis=0) + 1e-8
    nse_cota = 1.0 - numerator / denominator
    rmse_cota_w = jnp.sum(rmse_cota * pesos_cota) / jnp.sum(pesos_cota)
    rmse_vazao_w = jnp.sum(rmse_vazao * pesos_vazao) / jnp.sum(pesos_vazao)
    loss = sum_erro + rmse_cota_w + rmse_vazao_w / 25.0
    return loss, jnp.mean(nse_cota)


if __name__ == "__main__":
    key = jax.random.PRNGKey(0)
    k1, k2, k3, k4 = jax.random.split(key, 4)

    B, TC, TV = 200, 7, 10   # batch x 7 cota days / 10 vazao days (module weights)

    obs_cota = jax.random.uniform(k1, (B, TC), jnp.float32, 0.5, 3.0)
    pred_cota = obs_cota + 0.1 * jax.random.normal(k2, (B, TC), jnp.float32)
    pred_cota = pred_cota.at[0, 0].set(-0.05)     # trigger the 5**count penalty
    pred_cota = pred_cota.at[17, 3].set(-0.20)

    # TODO(synk): ajuste_vazao (scipy curve_fit rating-curve fit over y_obs[1]/y_obs[2])
    # is host-side preprocessing; the kernel consumes its per-day result directly.
    vazao = jax.random.uniform(k3, (TV,), jnp.float32, 40.0, 160.0)
    pred_vazao = vazao[None, :] + 5.0 * jax.random.normal(k4, (B, TV), jnp.float32)
    pred_vazao = pred_vazao.at[3, 8].set(-1.0)

    media = jnp.mean(obs_cota, axis=0)            # per-day climatological mean (module param)

    loss, nse = custom_loss3(pred_cota, obs_cota, pred_vazao, vazao, media)
    loss, nse = jax.block_until_ready((loss, nse))

    ref_loss, ref_nse = jax.block_until_ready(
        _reference_forward(pred_cota, obs_cota, pred_vazao, vazao, media))

    np.testing.assert_allclose(np.asarray(loss), np.asarray(ref_loss),
                               rtol=1e-4, atol=1e-4)
    np.testing.assert_allclose(np.asarray(nse), np.asarray(ref_nse),
                               rtol=1e-4, atol=1e-4)

    print("KERNEL_OK")
</pallas_src>

<mosaic_0001>
module attributes {stable_mosaic.version = 11 : i64} {
  func.func @_custom_loss3_kernel(%arg0: i32, %arg1: memref<7x128xf32, #tpu.memory_space<vmem>>, %arg2: memref<7x128xf32, #tpu.memory_space<vmem>>, %arg3: memref<10x128xf32, #tpu.memory_space<vmem>>, %arg4: memref<7x1xf32, #tpu.memory_space<vmem>>, %arg5: memref<10x1xf32, #tpu.memory_space<vmem>>, %arg6: memref<7x1xf32, #tpu.memory_space<vmem>>, %arg7: memref<10x1xf32, #tpu.memory_space<vmem>>, %arg8: memref<1x1xf32, #tpu.memory_space<vmem>>, %arg9: memref<1x1xf32, #tpu.memory_space<vmem>>, %arg10: memref<7x128xf32, #tpu.memory_space<vmem>>, %arg11: memref<7x128xf32, #tpu.memory_space<vmem>>, %arg12: memref<10x128xf32, #tpu.memory_space<vmem>>, %arg13: memref<7x128xf32, #tpu.memory_space<vmem>>, %arg14: memref<10x128xf32, #tpu.memory_space<vmem>>) attributes {dimension_semantics = [#tpu.dimension_semantics<arbitrary>], iteration_bounds = array<i64: 2>, scalar_prefetch = 0 : i64, scratch_operands = 5 : i64, tpu.core_type = #tpu.core_type<tc>, window_params = [{transform_indices = @transform_0, window_bounds = array<i64: 7, 128>}, {transform_indices = @transform_1, window_bounds = array<i64: 7, 128>}, {transform_indices = @transform_2, window_bounds = array<i64: 10, 128>}, {pipeline_mode = #tpu.pipeline_mode<synchronous>, transform_indices = @transform_3, window_bounds = array<i64: 7, 1>}, {pipeline_mode = #tpu.pipeline_mode<synchronous>, transform_indices = @transform_4, window_bounds = array<i64: 10, 1>}, {pipeline_mode = #tpu.pipeline_mode<synchronous>, transform_indices = @transform_5, window_bounds = array<i64: 7, 1>}, {pipeline_mode = #tpu.pipeline_mode<synchronous>, transform_indices = @transform_6, window_bounds = array<i64: 10, 1>}, {pipeline_mode = #tpu.pipeline_mode<synchronous>, transform_indices = @transform_7, window_bounds = array<i64: 1, 1>}, {pipeline_mode = #tpu.pipeline_mode<synchronous>, transform_indices = @transform_8, window_bounds = array<i64: 1, 1>}]} {
    %c0_i32 = arith.constant 0 : i32
    %0 = arith.cmpi eq, %arg0, %c0_i32 : i32
    %1 = arith.extui %0 : i1 to i32
    %c0_i32_0 = arith.constant 0 : i32
    %2 = arith.cmpi ne, %1, %c0_i32_0 : i32
    scf.if %2 {
      %cst_39 = arith.constant 0.000000e+00 : f32
      %66 = vector.broadcast %cst_39 : f32 to vector<7x128xf32>
      %c0_40 = arith.constant 0 : index
      %c0_41 = arith.constant 0 : index
      %67 = vector.load %arg10[%c0_40, %c0_41] : memref<7x128xf32, #tpu.memory_space<vmem>>, vector<7x128xf32>
      tpu.vector_store %arg10[%c0_40, %c0_41], %66 {strides = array<i32>} : memref<7x128xf32, #tpu.memory_space<vmem>>, vector<7x128xf32>,
      %cst_42 = arith.constant 0.000000e+00 : f32
      %68 = vector.broadcast %cst_42 : f32 to vector<7x128xf32>
      %c0_43 = arith.constant 0 : index
      %c0_44 = arith.constant 0 : index
      %69 = vector.load %arg11[%c0_43, %c0_44] : memref<7x128xf32, #tpu.memory_space<vmem>>, vector<7x128xf32>
      tpu.vector_store %arg11[%c0_43, %c0_44], %68 {strides = array<i32>} : memref<7x128xf32, #tpu.memory_space<vmem>>, vector<7x128xf32>,
      %cst_45 = arith.constant 0.000000e+00 : f32
      %70 = vector.broadcast %cst_45 : f32 to vector<10x128xf32>
      %c0_46 = arith.constant 0 : index
      %c0_47 = arith.constant 0 : index
      %71 = vector.load %arg12[%c0_46, %c0_47] : memref<10x128xf32, #tpu.memory_space<vmem>>, vector<10x128xf32>
      tpu.vector_store %arg12[%c0_46, %c0_47], %70 {strides = array<i32>} : memref<10x128xf32, #tpu.memory_space<vmem>>, vector<10x128xf32>,
      %cst_48 = arith.constant 0.000000e+00 : f32
      %72 = vector.broadcast %cst_48 : f32 to vector<7x128xf32>
      %c0_49 = arith.constant 0 : index
      %c0_50 = arith.constant 0 : index
      %73 = vector.load %arg13[%c0_49, %c0_50] : memref<7x128xf32, #tpu.memory_space<vmem>>, vector<7x128xf32>
      tpu.vector_store %arg13[%c0_49, %c0_50], %72 {strides = array<i32>} : memref<7x128xf32, #tpu.memory_space<vmem>>, vector<7x128xf32>,
      %cst_51 = arith.constant 0.000000e+00 : f32
      %74 = vector.broadcast %cst_51 : f32 to vector<10x128xf32>
      %c0_52 = arith.constant 0 : index
      %c0_53 = arith.constant 0 : index
      %75 = vector.load %arg14[%c0_52, %c0_53] : memref<10x128xf32, #tpu.memory_space<vmem>>, vector<10x128xf32>
      tpu.vector_store %arg14[%c0_52, %c0_53], %74 {strides = array<i32>} : memref<10x128xf32, #tpu.memory_space<vmem>>, vector<10x128xf32>,
    } else {
    }
    %3 = tpu.iota {dimensions = array<i32: 1>} : vector<1x128xi32>
    %c128_i32 = arith.constant 128 : i32
    %4 = arith.muli %arg0, %c128_i32 : i32
    %5 = vector.broadcast %4 : i32 to vector<1x128xi32>
    %6 = arith.addi %5, %3 : vector<1x128xi32>
    %c200_i32 = arith.constant 200 : i32
    %7 = vector.broadcast %c200_i32 : i32 to vector<1x128xi32>
    %8 = arith.cmpi slt, %6, %7 : vector<1x128xi32>
    %c0 = arith.constant 0 : index
    %c0_1 = arith.constant 0 : index
    %9 = vector.load %arg1[%c0, %c0_1] : memref<7x128xf32, #tpu.memory_space<vmem>>, vector<7x128xf32>
    %c0_2 = arith.constant 0 : index
    %c0_3 = arith.constant 0 : index
    %10 = vector.load %arg2[%c0_2, %c0_3] : memref<7x128xf32, #tpu.memory_space<vmem>>, vector<7x128xf32>
    %c0_4 = arith.constant 0 : index
    %c0_5 = arith.constant 0 : index
    %11 = vector.load %arg3[%c0_4, %c0_5] : memref<10x128xf32, #tpu.memory_space<vmem>>, vector<10x128xf32>
    %c0_6 = arith.constant 0 : index
    %c0_7 = arith.constant 0 : index
    %12 = vector.load %arg4[%c0_6, %c0_7] : memref<7x1xf32, #tpu.memory_space<vmem>>, vector<7x1xf32>
    %c0_8 = arith.constant 0 : index
    %c0_9 = arith.constant 0 : index
    %13 = vector.load %arg5[%c0_8, %c0_9] : memref<10x1xf32, #tpu.memory_space<vmem>>, vector<10x1xf32>
    %14 = arith.subf %9, %10 : vector<7x128xf32>
    %15 = arith.mulf %14, %14 : vector<7x128xf32>
    %cst = arith.constant 0.000000e+00 : f32
    %16 = vector.shape_cast %8 : vector<1x128xi1> to vector<1x128xi1>
    %17 = vector.broadcast %16 : vector<1x128xi1> to vector<7x128xi1>
    %18 = vector.broadcast %cst : f32 to vector<7x128xf32>
    %19 = arith.select %17, %15, %18 : vector<7x128xi1>, vector<7x128xf32>
    %20 = vector.broadcast %12 : vector<7x1xf32> to vector<7x128xf32>
    %21 = arith.subf %10, %20 : vector<7x128xf32>
    %22 = arith.mulf %21, %21 : vector<7x128xf32>
    %cst_10 = arith.constant 0.000000e+00 : f32
    %23 = vector.shape_cast %8 : vector<1x128xi1> to vector<1x128xi1>
    %24 = vector.broadcast %23 : vector<1x128xi1> to vector<7x128xi1>
    %25 = vector.broadcast %cst_10 : f32 to vector<7x128xf32>
    %26 = arith.select %24, %22, %25 : vector<7x128xi1>, vector<7x128xf32>
    %27 = vector.broadcast %13 : vector<10x1xf32> to vector<10x128xf32>
    %28 = arith.subf %11, %27 : vector<10x128xf32>
    %29 = arith.mulf %28, %28 : vector<10x128xf32>
    %cst_11 = arith.constant 0.000000e+00 : f32
    %30 = vector.shape_cast %8 : vector<1x128xi1> to vector<1x128xi1>
    %31 = vector.broadcast %30 : vector<1x128xi1> to vector<10x128xi1>
    %32 = vector.broadcast %cst_11 : f32 to vector<10x128xf32>
    %33 = arith.select %31, %29, %32 : vector<10x128xi1>, vector<10x128xf32>
    %cst_12 = arith.constant 0.000000e+00 : f32
    %34 = vector.broadcast %cst_12 : f32 to vector<7x128xf32>
    %35 = arith.cmpf olt, %9, %34 : vector<7x128xf32>
    %36 = vector.broadcast %8 : vector<1x128xi1> to vector<7x128xi1>
    %37 = arith.andi %36, %35 : vector<7x128xi1>
    %cst_13 = arith.constant 1.000000e+00 : f32
    %cst_14 = arith.constant 0.000000e+00 : f32
    %38 = vector.broadcast %cst_13 : f32 to vector<7x128xf32>
    %39 = vector.broadcast %cst_14 : f32 to vector<7x128xf32>
    %40 = arith.select %37, %38, %39 : vector<7x128xi1>, vector<7x128xf32>
    %cst_15 = arith.constant 0.000000e+00 : f32
    %41 = vector.broadcast %cst_15 : f32 to vector<10x128xf32>
    %42 = arith.cmpf olt, %11, %41 : vector<10x128xf32>
    %43 = vector.broadcast %8 : vector<1x128xi1> to vector<10x128xi1>
    %44 = arith.andi %43, %42 : vector<10x128xi1>
    %cst_16 = arith.constant 1.000000e+00 : f32
    %cst_17 = arith.constant 0.000000e+00 : f32
    %45 = vector.broadcast %cst_16 : f32 to vector<10x128xf32>
    %46 = vector.broadcast %cst_17 : f32 to vector<10x128xf32>
    %47 = arith.select %44, %45, %46 : vector<10x128xi1>, vector<10x128xf32>
    %c0_18 = arith.constant 0 : index
    %c0_19 = arith.constant 0 : index
    %48 = vector.load %arg10[%c0_18, %c0_19] : memref<7x128xf32, #tpu.memory_space<vmem>>, vector<7x128xf32>
    %49 = arith.addf %48, %19 : vector<7x128xf32>
    %c0_20 = arith.constant 0 : index
    %c0_21 = arith.constant 0 : index
    %50 = vector.load %arg10[%c0_20, %c0_21] : memref<7x128xf32, #tpu.memory_space<vmem>>, vector<7x128xf32>
    tpu.vector_store %arg10[%c0_20, %c0_21], %49 {strides = array<i32>} : memref<7x128xf32, #tpu.memory_space<vmem>>, vector<7x128xf32>,
    %c0_22 = arith.constant 0 : index
    %c0_23 = arith.constant 0 : index
    %51 = vector.load %arg11[%c0_22, %c0_23] : memref<7x128xf32, #tpu.memory_space<vmem>>, vector<7x128xf32>
    %52 = arith.addf %51, %26 : vector<7x128xf32>
    %c0_24 = arith.constant 0 : index
    %c0_25 = arith.constant 0 : index
    %53 = vector.load %arg11[%c0_24, %c0_25] : memref<7x128xf32, #tpu.memory_space<vmem>>, vector<7x128xf32>
    tpu.vector_store %arg11[%c0_24, %c0_25], %52 {strides = array<i32>} : memref<7x128xf32, #tpu.memory_space<vmem>>, vector<7x128xf32>,
    %c0_26 = arith.constant 0 : index
    %c0_27 = arith.constant 0 : index
    %54 = vector.load %arg12[%c0_26, %c0_27] : memref<10x128xf32, #tpu.memory_space<vmem>>, vector<10x128xf32>
    %55 = arith.addf %54, %33 : vector<10x128xf32>
    %c0_28 = arith.constant 0 : index
    %c0_29 = arith.constant 0 : index
    %56 = vector.load %arg12[%c0_28, %c0_29] : memref<10x128xf32, #tpu.memory_space<vmem>>, vector<10x128xf32>
    tpu.vector_store %arg12[%c0_28, %c0_29], %55 {strides = array<i32>} : memref<10x128xf32, #tpu.memory_space<vmem>>, vector<10x128xf32>,
    %c0_30 = arith.constant 0 : index
    %c0_31 = arith.constant 0 : index
    %57 = vector.load %arg13[%c0_30, %c0_31] : memref<7x128xf32, #tpu.memory_space<vmem>>, vector<7x128xf32>
    %58 = arith.addf %57, %40 : vector<7x128xf32>
    %c0_32 = arith.constant 0 : index
    %c0_33 = arith.constant 0 : index
    %59 = vector.load %arg13[%c0_32, %c0_33] : memref<7x128xf32, #tpu.memory_space<vmem>>, vector<7x128xf32>
    tpu.vector_store %arg13[%c0_32, %c0_33], %58 {strides = array<i32>} : memref<7x128xf32, #tpu.memory_space<vmem>>, vector<7x128xf32>,
    %c0_34 = arith.constant 0 : index
    %c0_35 = arith.constant 0 : index
    %60 = vector.load %arg14[%c0_34, %c0_35] : memref<10x128xf32, #tpu.memory_space<vmem>>, vector<10x128xf32>
    %61 = arith.addf %60, %47 : vector<10x128xf32>
    %c0_36 = arith.constant 0 : index
    %c0_37 = arith.constant 0 : index
    %62 = vector.load %arg14[%c0_36, %c0_37] : memref<10x128xf32, #tpu.memory_space<vmem>>, vector<10x128xf32>
    tpu.vector_store %arg14[%c0_36, %c0_37], %61 {strides = array<i32>} : memref<10x128xf32, #tpu.memory_space<vmem>>, vector<10x128xf32>,
    %c1_i32 = arith.constant 1 : i32
    %63 = arith.cmpi eq, %arg0, %c1_i32 : i32
    %64 = arith.extui %63 : i1 to i32
    %c0_i32_38 = arith.constant 0 : i32
    %65 = arith.cmpi ne, %64, %c0_i32_38 : i32
    scf.if %65 {
      %c0_39 = arith.constant 0 : index
      %c0_40 = arith.constant 0 : index
      %66 = vector.load %arg10[%c0_39, %c0_40] : memref<7x128xf32, #tpu.memory_space<vmem>>, vector<7x128xf32>
      %cst_41 = arith.constant dense<0.000000e+00> : vector<7xf32>
      %67 = vector.multi_reduction <add>, %66, %cst_41 [1] : vector<7x128xf32> to vector<7xf32>
      %68 = vector.shape_cast %67 : vector<7xf32> to vector<7x1xf32>
      %c0_42 = arith.constant 0 : index
      %c0_43 = arith.constant 0 : index
      %69 = vector.load %arg11[%c0_42, %c0_43] : memref<7x128xf32, #tpu.memory_space<vmem>>, vector<7x128xf32>
      %cst_44 = arith.constant dense<0.000000e+00> : vector<7xf32>
      %70 = vector.multi_reduction <add>, %69, %cst_44 [1] : vector<7x128xf32> to vector<7xf32>
      %71 = vector.shape_cast %70 : vector<7xf32> to vector<7x1xf32>
      %c0_45 = arith.constant 0 : index
      %c0_46 = arith.constant 0 : index
      %72 = vector.load %arg12[%c0_45, %c0_46] : memref<10x128xf32, #tpu.memory_space<vmem>>, vector<10x128xf32>
      %cst_47 = arith.constant dense<0.000000e+00> : vector<10xf32>
      %73 = vector.multi_reduction <add>, %72, %cst_47 [1] : vector<10x128xf32> to vector<10xf32>
      %74 = vector.shape_cast %73 : vector<10xf32> to vector<10x1xf32>
      %c0_48 = arith.constant 0 : index
      %c0_49 = arith.constant 0 : index
      %75 = vector.load %arg13[%c0_48, %c0_49] : memref<7x128xf32, #tpu.memory_space<vmem>>, vector<7x128xf32>
      %76 = vector.shape_cast %75 : vector<7x128xf32> to vector<1x7x128xf32>
      %cst_50 = arith.constant dense<0.000000e+00> : vector<1xf32>
      %77 = vector.multi_reduction <add>, %76, %cst_50 [1, 2] : vector<1x7x128xf32> to vector<1xf32>
      %78 = vector.shape_cast %77 : vector<1xf32> to vector<1x1x1xf32>
      %79 = vector.extract %78[0, 0, 0] : f32 from vector<1x1x1xf32>
      %c0_51 = arith.constant 0 : index
      %c0_52 = arith.constant 0 : index
      %80 = vector.load %arg14[%c0_51, %c0_52] : memref<10x128xf32, #tpu.memory_space<vmem>>, vector<10x128xf32>
      %81 = vector.shape_cast %80 : vector<10x128xf32> to vector<1x10x128xf32>
      %cst_53 = arith.constant dense<0.000000e+00> : vector<1xf32>
      %82 = vector.multi_reduction <add>, %81, %cst_53 [1, 2] : vector<1x10x128xf32> to vector<1xf32>
      %83 = vector.shape_cast %82 : vector<1xf32> to vector<1x1x1xf32>
      %84 = vector.extract %83[0, 0, 0] : f32 from vector<1x1x1xf32>
      %85 = arith.addf %79, %84 : f32
      %cst_54 = arith.constant 5.000000e-03 : f32
      %86 = vector.broadcast %cst_54 : f32 to vector<7x1xf32>
      %87 = arith.mulf %68, %86 : vector<7x1xf32>
      %88 = math.sqrt %87 : vector<7x1xf32>
      %cst_55 = arith.constant 5.000000e-03 : f32
      %89 = vector.broadcast %cst_55 : f32 to vector<10x1xf32>
      %90 = arith.mulf %74, %89 : vector<10x1xf32>
      %91 = math.sqrt %90 : vector<10x1xf32>
      %c0_56 = arith.constant 0 : index
      %c0_57 = arith.constant 0 : index
      %92 = vector.load %arg6[%c0_56, %c0_57] : memref<7x1xf32, #tpu.memory_space<vmem>>, vector<7x1xf32>
      %c0_58 = arith.constant 0 : index
      %c0_59 = arith.constant 0 : index
      %93 = vector.load %arg7[%c0_58, %c0_59] : memref<10x1xf32, #tpu.memory_space<vmem>>, vector<10x1xf32>
      %94 = arith.mulf %88, %92 : vector<7x1xf32>
      %95 = vector.shape_cast %94 : vector<7x1xf32> to vector<1x7x1xf32>
      %cst_60 = arith.constant dense<0.000000e+00> : vector<1xf32>
      %96 = vector.multi_reduction <add>, %95, %cst_60 [1, 2] : vector<1x7x1xf32> to vector<1xf32>
      %97 = vector.shape_cast %96 : vector<1xf32> to vector<1x1x1xf32>
      %98 = vector.extract %97[0, 0, 0] : f32 from vector<1x1x1xf32>
      %99 = vector.shape_cast %92 : vector<7x1xf32> to vector<1x7x1xf32>
      %cst_61 = arith.constant dense<0.000000e+00> : vector<1xf32>
      %100 = vector.multi_reduction <add>, %99, %cst_61 [1, 2] : vector<1x7x1xf32> to vector<1xf32>
      %101 = vector.shape_cast %100 : vector<1xf32> to vector<1x1x1xf32>
      %102 = vector.extract %101[0, 0, 0] : f32 from vector<1x1x1xf32>
      %103 = arith.divf %98, %102 : f32
      %104 = arith.mulf %91, %93 : vector<10x1xf32>
      %105 = vector.shape_cast %104 : vector<10x1xf32> to vector<1x10x1xf32>
      %cst_62 = arith.constant dense<0.000000e+00> : vector<1xf32>
      %106 = vector.multi_reduction <add>, %105, %cst_62 [1, 2] : vector<1x10x1xf32> to vector<1xf32>
      %107 = vector.shape_cast %106 : vector<1xf32> to vector<1x1x1xf32>
      %108 = vector.extract %107[0, 0, 0] : f32 from vector<1x1x1xf32>
      %109 = vector.shape_cast %93 : vector<10x1xf32> to vector<1x10x1xf32>
      %cst_63 = arith.constant dense<0.000000e+00> : vector<1xf32>
      %110 = vector.multi_reduction <add>, %109, %cst_63 [1, 2] : vector<1x10x1xf32> to vector<1xf32>
      %111 = vector.shape_cast %110 : vector<1xf32> to vector<1x1x1xf32>
      %112 = vector.extract %111[0, 0, 0] : f32 from vector<1x1x1xf32>
      %113 = arith.divf %108, %112 : f32
      %cst_64 = arith.constant 9.99999993E-9 : f32
      %114 = vector.broadcast %cst_64 : f32 to vector<7x1xf32>
      %115 = arith.addf %71, %114 : vector<7x1xf32>
      %116 = arith.divf %68, %115 : vector<7x1xf32>
      %cst_65 = arith.constant 1.000000e+00 : f32
      %117 = vector.broadcast %cst_65 : f32 to vector<7x1xf32>
      %118 = arith.subf %117, %116 : vector<7x1xf32>
      %119 = vector.shape_cast %118 : vector<7x1xf32> to vector<1x7x1xf32>
      %cst_66 = arith.constant dense<0.000000e+00> : vector<1xf32>
      %120 = vector.multi_reduction <add>, %119, %cst_66 [1, 2] : vector<1x7x1xf32> to vector<1xf32>
      %121 = vector.shape_cast %120 : vector<1xf32> to vector<1x1x1xf32>
      %122 = vector.extract %121[0, 0, 0] : f32 from vector<1x1x1xf32>
      %cst_67 = arith.constant 7.000000e+00 : f32
      %123 = arith.divf %122, %cst_67 : f32
      %cst_68 = arith.constant 1.60943794 : f32
      %124 = arith.mulf %85, %cst_68 : f32
      %125 = math.exp %124 : f32
      %126 = arith.addf %125, %103 : f32
      %cst_69 = arith.constant 2.500000e+01 : f32
      %127 = arith.divf %113, %cst_69 : f32
      %128 = arith.addf %126, %127 : f32
      %129 = vector.broadcast %128 : f32 to vector<1x1xf32>
      %c0_70 = arith.constant 0 : index
      %c0_71 = arith.constant 0 : index
      %130 = vector.load %arg8[%c0_70, %c0_71] : memref<1x1xf32, #tpu.memory_space<vmem>>, vector<1x1xf32>
      tpu.vector_store %arg8[%c0_70, %c0_71], %129 {strides = array<i32>} : memref<1x1xf32, #tpu.memory_space<vmem>>, vector<1x1xf32>,
      %131 = vector.broadcast %123 : f32 to vector<1x1xf32>
      %c0_72 = arith.constant 0 : index
      %c0_73 = arith.constant 0 : index
      %132 = vector.load %arg9[%c0_72, %c0_73] : memref<1x1xf32, #tpu.memory_space<vmem>>, vector<1x1xf32>
      tpu.vector_store %arg9[%c0_72, %c0_73], %131 {strides = array<i32>} : memref<1x1xf32, #tpu.memory_space<vmem>>, vector<1x1xf32>,
    } else {
    }
    return
  }
  func.func @transform_0(%arg0: i32) -> (i32, i32) {
    %c0_i32 = arith.constant 0 : i32
    %c0_i32_0 = arith.constant 0 : i32
    return %c0_i32, %arg0 : i32, i32
  }
  func.func @transform_1(%arg0: i32) -> (i32, i32) {
    %c0_i32 = arith.constant 0 : i32
    %c0_i32_0 = arith.constant 0 : i32
    return %c0_i32, %arg0 : i32, i32
  }
  func.func @transform_2(%arg0: i32) -> (i32, i32) {
    %c0_i32 = arith.constant 0 : i32
    %c0_i32_0 = arith.constant 0 : i32
    return %c0_i32, %arg0 : i32, i32
  }
  func.func @transform_3(%arg0: i32) -> (i32, i32) {
    %c0_i32 = arith.constant 0 : i32
    %c0_i32_0 = arith.constant 0 : i32
    %c0_i32_1 = arith.constant 0 : i32
    return %c0_i32, %c0_i32_0 : i32, i32
  }
  func.func @transform_4(%arg0: i32) -> (i32, i32) {
    %c0_i32 = arith.constant 0 : i32
    %c0_i32_0 = arith.constant 0 : i32
    %c0_i32_1 = arith.constant 0 : i32
    return %c0_i32, %c0_i32_0 : i32, i32
  }
  func.func @transform_5(%arg0: i32) -> (i32, i32) {
    %c0_i32 = arith.constant 0 : i32
    %c0_i32_0 = arith.constant 0 : i32
    %c0_i32_1 = arith.constant 0 : i32
    return %c0_i32, %c0_i32_0 : i32, i32
  }
  func.func @transform_6(%arg0: i32) -> (i32, i32) {
    %c0_i32 = arith.constant 0 : i32
    %c0_i32_0 = arith.constant 0 : i32
    %c0_i32_1 = arith.constant 0 : i32
    return %c0_i32, %c0_i32_0 : i32, i32
  }
  func.func @transform_7(%arg0: i32) -> (i32, i32) {
    %c0_i32 = arith.constant 0 : i32
    %c0_i32_0 = arith.constant 0 : i32
    %c0_i32_1 = arith.constant 0 : i32
    return %c0_i32, %c0_i32_0 : i32, i32
  }
  func.func @transform_8(%arg0: i32) -> (i32, i32) {
    %c0_i32 = arith.constant 0 : i32
    %c0_i32_0 = arith.constant 0 : i32
    %c0_i32_1 = arith.constant 0 : i32
    return %c0_i32, %c0_i32_0 : i32, i32
  }
}

</mosaic_0001>

<llo_original>
// kernel: tpu_custom_call.1
$region0: #{tpu_custom_call.1}
  #allocation0 [shape = 'u32[]', space=smem, size = 0x4, offset = 0x4, fixed_abs, tag = 'smem constant byte address 0x4 - core index']
  #allocation1 [shape = 'u32[144,128]{1,0:T(1,128)}', space=vmem, size = 0x12000, scoped, tag = 'internal scratch']
  #allocation2 [shape = 'f32[7,128]{1,0:T(8,128)}', space=vmem, size = 0x1000, scoped, tag = 'scratch operand']
  #allocation3 [shape = 'f32[7,128]{1,0:T(8,128)}', space=vmem, size = 0x1000, scoped, tag = 'scratch operand']
  #allocation4 [shape = 'f32[10,128]{1,0:T(8,128)}', space=vmem, size = 0x2000, scoped, tag = 'scratch operand']
  #allocation5 [shape = 'f32[7,128]{1,0:T(8,128)}', space=vmem, size = 0x1000, scoped, tag = 'scratch operand']
  #allocation6 [shape = 'f32[10,128]{1,0:T(8,128)}', space=vmem, size = 0x2000, scoped, tag = 'scratch operand']
  %s0 = inlined_call_operand.vmem [shape: f32[7,256], index: 0, kind: input, shape index: {}]
  %s1 = inlined_call_operand.hbm [shape: f32[7,256], index: 1, kind: input, shape index: {}]
  %s2 = inlined_call_operand.vmem [shape: f32[10,256], index: 2, kind: input, shape index: {}]
  %s3 = inlined_call_operand.vmem [shape: f32[7,1], index: 3, kind: input, shape index: {}]
  %s4 = inlined_call_operand.vmem [shape: f32[10,1], index: 4, kind: input, shape index: {}]
  %s5 = inlined_call_operand.vmem [shape: f32[7,1], index: 5, kind: input, shape index: {}]
  %s6 = inlined_call_operand.vmem [shape: f32[10,1], index: 6, kind: input, shape index: {}]
  %s7 = inlined_call_operand.hbm [shape: f32[1,1], index: 7, kind: output, shape index: {0}]
  %s8 = inlined_call_operand.hbm [shape: f32[1,1], index: 8, kind: output, shape index: {1}]
  %9 = xla_tuple %s7, %s8
  %s10 = sld [smem:[#allocation0]]
  $region119: #{tpu_custom_call.1} parent=0
    _
  %s12 = ssub.s32 1, %s10
  %s13 = scalar_select 0, %s12, %s10
  $region1: #{tpu_custom_call.1} parent=0
    #allocation7 [shape = 'u8[8192]{0}', space=vmem, size = 0x2000, scoped, tag = 'input window, operand 1']
    #allocation8 [shape = 's32[2]{0}', space=sflag, size = 0x8, scoped, tag = 'scoped memory for tpu_custom_call.1']
    #allocation9 [shape = 's32[2]{0}', space=sflag, size = 0x8, scoped, tag = 'scoped memory for tpu_custom_call.1']
    #allocation10 [shape = 'u8[16384]{0}', space=vmem, size = 0x4000, scoped, tag = 'input window, operand 2']
    #allocation11 [shape = 'u8[512]{0}', space=vmem, size = 0x400, scoped, tag = 'output window, operand 0, single buffered']
    #allocation12 [shape = 'u8[512]{0}', space=vmem, size = 0x400, scoped, tag = 'output window, operand 1, single buffered']
    #allocation13 [shape = 's32[1]{0}', space=sflag, size = 0x4, scoped, tag = 'scoped memory for tpu_custom_call.1']
    %14 = vsyncpa [#allocation8], 0
    %s15 = scalar_lea.sflag [#allocation8], 1
    %16 = vsyncpa %s15, 0
    %17 = vsyncpa [#allocation9], 0
    %18 = vsyncpa [#allocation13], 0
    loop: start=0, step=1, limit=4
    $region2: #{tpu_custom_call.1} parent=1 // loop_pre_header
      _
    $region3: #{tpu_custom_call.1} parent=1 // loop_header
      %s20 = sphi 0, %s24
      %p21 = scmp.ge.s32.totalorder %s20, 4
      %s30 = sphi 0, %s32
      %s33 = sphi 0, %s30
      %s34 = sphi 0, %s33
      %s50 = sphi 0, %s34
      %s56 = sphi 0, %s58
      %s59 = sphi 0, %s56
      %s60 = sphi 0, %s59
      %s76 = sphi 0, %s60
      %s82 = sphi 0, %s84
      %s85 = sphi 0, %s82
      %s86 = sphi 0, %s85
      %s102 = sphi 0, %s86
      %s106 = sphi 0, %s106
      %s108 = sphi 0, %s106
      %s109 = sphi 0, %s108
      %s123 = sphi 0, %s109
      %s127 = sphi 0, %s127
      %s129 = sphi 0, %s127
      %s130 = sphi 0, %s129
      %s144 = sphi 0, %s130
      %s148 = sphi 0, %s148
      %s150 = sphi 0, %s148
      %s151 = sphi 0, %s150
      %s165 = sphi 0, %s151
      %s169 = sphi 0, %s169
      %s171 = sphi 0, %s169
      %s172 = sphi 0, %s171
      %s186 = sphi 0, %s172
      %s190 = sphi 0, %s190
      %s192 = sphi 0, %s190
      %s193 = sphi 0, %s192
      %s207 = sphi 0, %s193
      %s211 = sphi 0, %s211
      %s213 = sphi 0, %s211
      %s214 = sphi 0, %s213
      %s228 = sphi 0, %s214
    $region4: #{tpu_custom_call.1} parent=1 // loop_header_branch
      %23 = sbr.rel (%p21) target = $region8
    $region5: #{tpu_custom_call.1} parent=1 // loop_body
      %s25 = ssub.s32 %s20, 1
      %s26 = ssub.s32 %s20, 2
      %s27 = sadd.s32 %s20, 1
      %s28 = ssub.s32 %s20, %s27
      %p29 = scmp.eq.s32.totalorder %s28, 0
      %s31 = sadd.s32 %s30, 1
      %s32 = scalar_select %p29, %s30, %s31
      %p35 = pneg %p29
      %p36 = scmp.eq.s32.totalorder %s20, 1
      %p37 = por %p35, %p36
      %p38 = scmp.ne.s32.totalorder %s30, %s33
      %p39 = scmp.eq.s32.totalorder %s20, 0
      %p40 = por %p38, %p39
      %p41 = scmp.ne.s32.totalorder %s30, %s33
      %p42 = scmp.eq.s32.totalorder %s25, 1
      %p43 = por %p41, %p42
      %p44 = scmp.ne.s32.totalorder %s33, %s34
      %p45 = scmp.eq.s32.totalorder %s25, 0
      %p46 = por %p44, %p45
      %p47 = scmp.ne.s32.totalorder %s33, %s34
      %p48 = scmp.eq.s32.totalorder %s26, 1
      %p49 = por %p47, %p48
      %p51 = scmp.ne.s32.totalorder %s34, %s50
      %p52 = scmp.eq.s32.totalorder %s26, 0
      %p53 = por %p51, %p52
      %s54 = ssub.s32 %s20, %s27
      %p55 = scmp.eq.s32.totalorder %s54, 0
      %s57 = sadd.s32 %s56, 1
      %s58 = scalar_select %p55, %s56, %s57
      %p61 = pneg %p55
      %p62 = scmp.eq.s32.totalorder %s20, 1
      %p63 = por %p61, %p62
      %p64 = scmp.ne.s32.totalorder %s56, %s59
      %p65 = scmp.eq.s32.totalorder %s20, 0
      %p66 = por %p64, %p65
      %p67 = scmp.ne.s32.totalorder %s56, %s59
      %p68 = scmp.eq.s32.totalorder %s25, 1
      %p69 = por %p67, %p68
      %p70 = scmp.ne.s32.totalorder %s59, %s60
      %p71 = scmp.eq.s32.totalorder %s25, 0
      %p72 = por %p70, %p71
      %p73 = scmp.ne.s32.totalorder %s59, %s60
      %p74 = scmp.eq.s32.totalorder %s26, 1
      %p75 = por %p73, %p74
      %p77 = scmp.ne.s32.totalorder %s60, %s76
      %p78 = scmp.eq.s32.totalorder %s26, 0
      %p79 = por %p77, %p78
      %s80 = ssub.s32 %s20, %s27
      %p81 = scmp.eq.s32.totalorder %s80, 0
      %s83 = sadd.s32 %s82, 1
      %s84 = scalar_select %p81, %s82, %s83
      %p87 = pneg %p81
      %p88 = scmp.eq.s32.totalorder %s20, 1
      %p89 = por %p87, %p88
      %p90 = scmp.ne.s32.totalorder %s82, %s85
      %p91 = scmp.eq.s32.totalorder %s20, 0
      %p92 = por %p90, %p91
      %p93 = scmp.ne.s32.totalorder %s82, %s85
      %p94 = scmp.eq.s32.totalorder %s25, 1
      %p95 = por %p93, %p94
      %p96 = scmp.ne.s32.totalorder %s85, %s86
      %p97 = scmp.eq.s32.totalorder %s25, 0
      %p98 = por %p96, %p97
      %p99 = scmp.ne.s32.totalorder %s85, %s86
      %p100 = scmp.eq.s32.totalorder %s26, 1
      %p101 = por %p99, %p100
      %p103 = scmp.ne.s32.totalorder %s86, %s102
      %p104 = scmp.eq.s32.totalorder %s26, 0
      %p105 = por %p103, %p104
      %s107 = sadd.s32 %s106, 1
      %p110 = scmp.eq.s32.totalorder %s20, 1
      %p111 = scmp.ne.s32.totalorder %s106, %s108
      %p112 = scmp.eq.s32.totalorder %s20, 0
      %p113 = por %p111, %p112
      %p114 = scmp.ne.s32.totalorder %s106, %s108
      %p115 = scmp.eq.s32.totalorder %s25, 1
      %p116 = por %p114, %p115
      %p117 = scmp.ne.s32.totalorder %s108, %s109
      %p118 = scmp.eq.s32.totalorder %s25, 0
      %p119 = por %p117, %p118
      %p120 = scmp.ne.s32.totalorder %s108, %s109
      %p121 = scmp.eq.s32.totalorder %s26, 1
      %p122 = por %p120, %p121
      %p124 = scmp.ne.s32.totalorder %s109, %s123
      %p125 = scmp.eq.s32.totalorder %s26, 0
      %p126 = por %p124, %p125
      %s128 = sadd.s32 %s127, 1
      %p131 = scmp.eq.s32.totalorder %s20, 1
      %p132 = scmp.ne.s32.totalorder %s127, %s129
      %p133 = scmp.eq.s32.totalorder %s20, 0
      %p134 = por %p132, %p133
      %p135 = scmp.ne.s32.totalorder %s127, %s129
      %p136 = scmp.eq.s32.totalorder %s25, 1
      %p137 = por %p135, %p136
      %p138 = scmp.ne.s32.totalorder %s129, %s130
      %p139 = scmp.eq.s32.totalorder %s25, 0
      %p140 = por %p138, %p139
      %p141 = scmp.ne.s32.totalorder %s129, %s130
      %p142 = scmp.eq.s32.totalorder %s26, 1
      %p143 = por %p141, %p142
      %p145 = scmp.ne.s32.totalorder %s130, %s144
      %p146 = scmp.eq.s32.totalorder %s26, 0
      %p147 = por %p145, %p146
      %s149 = sadd.s32 %s148, 1
      %p152 = scmp.eq.s32.totalorder %s20, 1
      %p153 = scmp.ne.s32.totalorder %s148, %s150
      %p154 = scmp.eq.s32.totalorder %s20, 0
      %p155 = por %p153, %p154
      %p156 = scmp.ne.s32.totalorder %s148, %s150
      %p157 = scmp.eq.s32.totalorder %s25, 1
      %p158 = por %p156, %p157
      %p159 = scmp.ne.s32.totalorder %s150, %s151
      %p160 = scmp.eq.s32.totalorder %s25, 0
      %p161 = por %p159, %p160
      %p162 = scmp.ne.s32.totalorder %s150, %s151
      %p163 = scmp.eq.s32.totalorder %s26, 1
      %p164 = por %p162, %p163
      %p166 = scmp.ne.s32.totalorder %s151, %s165
      %p167 = scmp.eq.s32.totalorder %s26, 0
      %p168 = por %p166, %p167
      %s170 = sadd.s32 %s169, 1
      %p173 = scmp.eq.s32.totalorder %s20, 1
      %p174 = scmp.ne.s32.totalorder %s169, %s171
      %p175 = scmp.eq.s32.totalorder %s20, 0
      %p176 = por %p174, %p175
      %p177 = scmp.ne.s32.totalorder %s169, %s171
      %p178 = scmp.eq.s32.totalorder %s25, 1
      %p179 = por %p177, %p178
      %p180 = scmp.ne.s32.totalorder %s171, %s172
      %p181 = scmp.eq.s32.totalorder %s25, 0
      %p182 = por %p180, %p181
      %p183 = scmp.ne.s32.totalorder %s171, %s172
      %p184 = scmp.eq.s32.totalorder %s26, 1
      %p185 = por %p183, %p184
      %p187 = scmp.ne.s32.totalorder %s172, %s186
      %p188 = scmp.eq.s32.totalorder %s26, 0
      %p189 = por %p187, %p188
      %s191 = sadd.s32 %s190, 1
      %p194 = scmp.eq.s32.totalorder %s20, 1
      %p195 = scmp.ne.s32.totalorder %s190, %s192
      %p196 = scmp.eq.s32.totalorder %s20, 0
      %p197 = por %p195, %p196
      %p198 = scmp.ne.s32.totalorder %s190, %s192
      %p199 = scmp.eq.s32.totalorder %s25, 1
      %p200 = por %p198, %p199
      %p201 = scmp.ne.s32.totalorder %s192, %s193
      %p202 = scmp.eq.s32.totalorder %s25, 0
      %p203 = por %p201, %p202
      %p204 = scmp.ne.s32.totalorder %s192, %s193
      %p205 = scmp.eq.s32.totalorder %s26, 1
      %p206 = por %p204, %p205
      %p208 = scmp.ne.s32.totalorder %s193, %s207
      %p209 = scmp.eq.s32.totalorder %s26, 0
      %p210 = por %p208, %p209
      %s212 = sadd.s32 %s211, 1
      %p215 = scmp.eq.s32.totalorder %s20, 1
      %p216 = scmp.ne.s32.totalorder %s211, %s213
      %p217 = scmp.eq.s32.totalorder %s20, 0
      %p218 = por %p216, %p217
      %p219 = scmp.ne.s32.totalorder %s211, %s213
      %p220 = scmp.eq.s32.totalorder %s25, 1
      %p221 = por %p219, %p220
      %p222 = scmp.ne.s32.totalorder %s213, %s214
      %p223 = scmp.eq.s32.totalorder %s25, 0
      %p224 = por %p222, %p223
      %p225 = scmp.ne.s32.totalorder %s213, %s214
      %p226 = scmp.eq.s32.totalorder %s26, 1
      %p227 = por %p225, %p226
      %p229 = scmp.ne.s32.totalorder %s214, %s228
      %p230 = scmp.eq.s32.totalorder %s26, 0
      %p231 = por %p229, %p230
      %p232 = scmp.le.s32.totalorder 1, %s20
      %p233 = scmp.lt.s32.totalorder %s20, 3
      %p234 = pnand %p232, %p233
      %p235 = pneg %p234
      // Predicated region
      $region9: #{tpu_custom_call.1} parent=5 // pred_check
        _
      $region10: #{tpu_custom_call.1} parent=5 // pred_check_branch
        %237 = sbr.rel (%p234) target = $region12
      $region11: #{tpu_custom_call.1} parent=5 // pred_region
        %s238 = ssub.s32 %s20, 1
        // Predicated region
        $region13: #{tpu_custom_call.1} parent=11 // pred_check
          %p239 = pneg %p119
        $region14: #{tpu_custom_call.1} parent=11 // pred_check_branch
          %241 = sbr.rel (%p239) target = $region16
        $region15: #{tpu_custom_call.1} parent=11 // pred_region
          _
        $region16: #{tpu_custom_call.1} parent=11 // pred_fallthru
          _
        // Predicated region
        $region17: #{tpu_custom_call.1} parent=11 // pred_check
          %p242 = pneg %p140
        $region18: #{tpu_custom_call.1} parent=11 // pred_check_branch
          %244 = sbr.rel (%p242) target = $region20
        $region19: #{tpu_custom_call.1} parent=11 // pred_region
          _
        $region20: #{tpu_custom_call.1} parent=11 // pred_fallthru
          _
        // Predicated region
        $region21: #{tpu_custom_call.1} parent=11 // pred_check
          %p245 = pneg %p161
        $region22: #{tpu_custom_call.1} parent=11 // pred_check_branch
          %247 = sbr.rel (%p245) target = $region24
        $region23: #{tpu_custom_call.1} parent=11 // pred_region
          _
        $region24: #{tpu_custom_call.1} parent=11 // pred_fallthru
          _
        // Predicated region
        $region25: #{tpu_custom_call.1} parent=11 // pred_check
          %p248 = pneg %p182
        $region26: #{tpu_custom_call.1} parent=11 // pred_check_branch
          %250 = sbr.rel (%p248) target = $region28
        $region27: #{tpu_custom_call.1} parent=11 // pred_region
          _
        $region28: #{tpu_custom_call.1} parent=11 // pred_fallthru
          _
      $region12: #{tpu_custom_call.1} parent=5 // pred_fallthru
        _
      %p251 = scmp.lt.s32.totalorder %s20, 2
      // Predicated region
      $region29: #{tpu_custom_call.1} parent=5 // pred_check
        %p252 = pneg %p251
      $region30: #{tpu_custom_call.1} parent=5 // pred_check_branch
        %254 = sbr.rel (%p252) target = $region32
      $region31: #{tpu_custom_call.1} parent=5 // pred_region
        // Predicated region
        $region33: #{tpu_custom_call.1} parent=31 // pred_check
          %p255 = pneg %p40
        $region34: #{tpu_custom_call.1} parent=31 // pred_check_branch
          %257 = sbr.rel (%p255) target = $region36
        $region35: #{tpu_custom_call.1} parent=31 // pred_region
          %p258 = scmp.lt.s32.totalorder %s20, 1
          %s259 = scalar_select %p258, %s20, 1
          %s260 = smul.addr %s259, 8
          %s261 = scalar_lea.vmem %s0, %s260
        $region36: #{tpu_custom_call.1} parent=31 // pred_fallthru
          _
        // Predicated region
        $region37: #{tpu_custom_call.1} parent=31 // pred_check
          %p262 = pneg %p66
        $region38: #{tpu_custom_call.1} parent=31 // pred_check_branch
          %264 = sbr.rel (%p262) target = $region40
        $region39: #{tpu_custom_call.1} parent=31 // pred_region
          %s265 = sand.u32 %s56, 1
          %s266 = scalar_lea.sflag [#allocation8], %s265
          %s267 = sand.u32 %s56, 1
          %s268 = smul.addr %s267, 8
          %s269 = scalar_lea.vmem [#allocation7], %s268
          %s271 = ssub.s32 128, 128
          %272 = vsyncadd %s266, %s271
          %s273 = smul.addr %s20, 128
          %s274 = scalar_lea.hbm %s1, %s273
          %s276 = sshll.u32 %s269, 4
          %s277 = int_to_ptr.vmem [resolvable:$true] %s276
          %279 = dma.hbm_to_vmem [thread:$0]  %s274, 128, %s277, %s266
        $region40: #{tpu_custom_call.1} parent=31 // pred_fallthru
          _
        // Predicated region
        $region41: #{tpu_custom_call.1} parent=31 // pred_check
          %p280 = pneg %p92
        $region42: #{tpu_custom_call.1} parent=31 // pred_check_branch
          %282 = sbr.rel (%p280) target = $region44
        $region43: #{tpu_custom_call.1} parent=31 // pred_region
          %s283 = sand.u32 %s82, 1
          %s284 = sand.u32 %s82, 1
          %s285 = smul.addr %s284, 16
          %s286 = scalar_lea.vmem [#allocation10], %s285
          %s287 = smul.addr %s20, 8
          %s288 = scalar_lea.vmem %s2, %s287
          // Predicated region
          $region45: #{tpu_custom_call.1} parent=43 // pred_check
            _
          $region46: #{tpu_custom_call.1} parent=43 // pred_check_branch
            %290 = sbr.rel (0) target = $region48
          $region47: #{tpu_custom_call.1} parent=43 // pred_region
            // Predicated region
            $region49: #{tpu_custom_call.1} parent=47 // pred_check
              _
            $region50: #{tpu_custom_call.1} parent=47 // pred_check_branch
              %292 = sbr.rel (0) target = $region52
            $region51: #{tpu_custom_call.1} parent=47 // pred_region
              // Predicated region
              $region64: #{tpu_custom_call.1} parent=51 // pred_check
                _
              $region65: #{tpu_custom_call.1} parent=51 // pred_check_branch
                %310 = sbr.rel (0) target = $region67
              $region66: #{tpu_custom_call.1} parent=51 // pred_region
                loop: start=0, step=1, limit=1
                $region68: #{tpu_custom_call.1} parent=66 // loop_pre_header
                  _
                $region69: #{tpu_custom_call.1} parent=66 // loop_header
                  %s312 = sphi 0, %s316
                  %p313 = scmp.ge.s32.totalorder %s312, 1
                  %s317 = sphi %s288, %s288
                  %s318 = sphi %s286, %s286
                $region70: #{tpu_custom_call.1} parent=66 // loop_header_branch
                  %315 = sbr.rel (%p313) target = $region74
                $region71: #{tpu_custom_call.1} parent=66 // loop_body
                  %v319 = vld [vmem:[%s317] sm:$0xff]
                  %320 = vst [vmem:[%s318] sm:$0xff] %v319
                  %v321 = vld [vmem:[%s317 + $0x10] sm:$0xff]
                  %322 = vst [vmem:[%s318 + $0x8] sm:$0xff] %v321
                $region72: #{tpu_custom_call.1} parent=66 // loop_footer
                  %s316 = sadd.s32 1, %s312
                $region73: #{tpu_custom_call.1} parent=66 // loop_footer_branch
                  %311 = sbr.rel target = $region69
                $region74: #{tpu_custom_call.1} parent=66 // loop_exit
                  _
              $region67: #{tpu_custom_call.1} parent=51 // pred_fallthru
                _
              // Predicated region
              $region75: #{tpu_custom_call.1} parent=51 // pred_check
                _
              $region76: #{tpu_custom_call.1} parent=51 // pred_check_branch
                %324 = sbr.rel target = $region78
              $region77: #{tpu_custom_call.1} parent=51 // pred_region
                _
              $region78: #{tpu_custom_call.1} parent=51 // pred_fallthru
                _
            $region52: #{tpu_custom_call.1} parent=47 // pred_fallthru
              _
            // Predicated region
            $region53: #{tpu_custom_call.1} parent=47 // pred_check
              _
            $region54: #{tpu_custom_call.1} parent=47 // pred_check_branch
              %294 = sbr.rel target = $region56
            $region55: #{tpu_custom_call.1} parent=47 // pred_region
              %s296 = ssub.s32 256, 1
              loop: start=0, step=1, limit=1
              $region57: #{tpu_custom_call.1} parent=55 // loop_pre_header
                _
              $region58: #{tpu_custom_call.1} parent=55 // loop_header
                %s298 = sphi 0, %s302
                %p299 = scmp.ge.s32.totalorder %s298, 1
                %s303 = sphi %s288, %s288
                %s304 = sphi %s286, %s286
              $region59: #{tpu_custom_call.1} parent=55 // loop_header_branch
                %301 = sbr.rel (%p299) target = $region63
              $region60: #{tpu_custom_call.1} parent=55 // loop_body
                %v305 = vld [vmem:[%s303] sm:%s296]
                %306 = vst [vmem:[%s304] sm:%s296] %v305
                %v307 = vld [vmem:[%s303 + $0x10] sm:%s296]
                %308 = vst [vmem:[%s304 + $0x8] sm:%s296] %v307
              $region61: #{tpu_custom_call.1} parent=55 // loop_footer
                %s302 = sadd.s32 1, %s298
              $region62: #{tpu_custom_call.1} parent=55 // loop_footer_branch
                %297 = sbr.rel target = $region58
              $region63: #{tpu_custom_call.1} parent=55 // loop_exit
                _
            $region56: #{tpu_custom_call.1} parent=47 // pred_fallthru
              _
          $region48: #{tpu_custom_call.1} parent=43 // pred_fallthru
            _
          %325 = vnop
        $region44: #{tpu_custom_call.1} parent=31 // pred_fallthru
          _
      $region32: #{tpu_custom_call.1} parent=5 // pred_fallthru
        _
      %p326 = scmp.le.s32.totalorder 1, %s20
      %p327 = scmp.lt.s32.totalorder %s20, 3
      %p328 = pnand %p326, %p327
      %p329 = pneg %p328
      // Predicated region
      $region79: #{tpu_custom_call.1} parent=5 // pred_check
        _
      $region80: #{tpu_custom_call.1} parent=5 // pred_check_branch
        %331 = sbr.rel (%p328) target = $region82
      $region81: #{tpu_custom_call.1} parent=5 // pred_region
        %s332 = ssub.s32 %s20, 1
        %s333 = sand.u32 %s59, 1
        %s334 = scalar_lea.sflag [#allocation8], %s333
        %s335 = sand.u32 %s59, 1
        %s336 = smul.addr %s335, 8
        %s337 = scalar_lea.vmem [#allocation7], %s336
        // Predicated region
        $region83: #{tpu_custom_call.1} parent=81 // pred_check
          %p338 = pneg %p72
        $region84: #{tpu_custom_call.1} parent=81 // pred_check_branch
          %340 = sbr.rel (%p338) target = $region86
        $region85: #{tpu_custom_call.1} parent=81 // pred_region
          %341 = dma.done %s334, 128
        $region86: #{tpu_custom_call.1} parent=81 // pred_fallthru
          _
        %s342 = sand.u32 %s85, 1
        %s343 = sand.u32 %s85, 1
        %s344 = smul.addr %s343, 16
        %s345 = scalar_lea.vmem [#allocation10], %s344
        // Predicated region
        $region87: #{tpu_custom_call.1} parent=81 // pred_check
          %p346 = pneg %p98
        $region88: #{tpu_custom_call.1} parent=81 // pred_check_branch
          %348 = sbr.rel (%p346) target = $region90
        $region89: #{tpu_custom_call.1} parent=81 // pred_region
          _
        $region90: #{tpu_custom_call.1} parent=81 // pred_fallthru
          _
        %p349 = scmp.lt.s32.totalorder %s25, 1
        %s350 = scalar_select %p349, %s25, 1
        %s351 = smul.addr %s350, 8
        %s352 = scalar_lea.vmem %s0, %s351
        %p353 = pneg %p46
        %p354 = pneg %p43
        %s355 = sand.u32 %s59, 1
        %s356 = scalar_lea.sflag [#allocation8], %s355
        %s357 = sand.u32 %s59, 1
        %s358 = smul.addr %s357, 8
        %s359 = scalar_lea.vmem [#allocation7], %s358
        %p360 = pneg %p72
        %p361 = pneg %p69
        %s362 = sand.u32 %s85, 1
        %s363 = sand.u32 %s85, 1
        %s364 = smul.addr %s363, 16
        %s365 = scalar_lea.vmem [#allocation10], %s364
        %p366 = pneg %p98
        %p367 = pneg %p95
        %p368 = pneg %p119
        %p369 = pneg %p116
        %p370 = pneg %p140
        %p371 = pneg %p137
        %p372 = pneg %p161
        %p373 = pneg %p158
        %p374 = pneg %p182
        %p375 = pneg %p179
        %p376 = pneg %p203
        %p377 = pneg %p200
        %p378 = pneg %p224
        %p379 = pneg %p221
        %p380 = scmp.lt.s32.totalorder %s25, 1
        %s381 = scalar_select %p380, %s25, 1
        %s382 = smul.addr %s381, 8
        %s383 = scalar_lea.vmem %s0, %s382
        %p384 = scmp.eq.s32.totalorder %s25, 0
        // Predicated region
        $region91: #{tpu_custom_call.1} parent=81 // pred_check
          %p385 = pneg %p384
        $region92: #{tpu_custom_call.1} parent=81 // pred_check_branch
          %387 = sbr.rel (%p385) target = $region94
        $region93: #{tpu_custom_call.1} parent=81 // pred_region
          %388 = vst [vmem:[#allocation2] sm:$0x7f] 0.0
          %389 = vst [vmem:[#allocation3] sm:$0x7f] 0.0
          %390 = vst [vmem:[#allocation4] sm:$0xff] 0.0
          %391 = vst [vmem:[#allocation4 + $0x8] sm:$0x3] 0.0
          %392 = vst [vmem:[#allocation5] sm:$0x7f] 0.0
          %393 = vst [vmem:[#allocation6] sm:$0xff] 0.0
          %394 = vst [vmem:[#allocation6 + $0x8] sm:$0x3] 0.0
        $region94: #{tpu_custom_call.1} parent=81 // pred_fallthru
          _
        %v395 = vlaneseq
        %v396 = vand.u32 %v395, 127
        %s397 = smul.u32 %s25, 128
        %v398 = vstv %s397
        %v399 = vadd.s32 %v398, %v396
        %vm400 = vcmp.lt.s32.totalorder %v399, 200
        %v401 = vld [vmem:[%s383] sm:$0x7f]
        %v402 = vld [vmem:[%s337] sm:$0x7f]
        %v403 = vld [vmem:[%s345] sm:$0xff]
        %v404 = vld [vmem:[%s345 + $0x8] sm:$0x3]
        %v405 = vld [vmem:[%s3] sm:$0x7f]
        %v406 = vld [vmem:[%s4] sm:$0xff]
        %v407 = vld [vmem:[%s4 + $0x8] sm:$0x3]
        %v408 = vsub.f32 %v401, %v402
        %v409 = vmul.f32 %v408, %v408
        %v410 = vsel %vm400, 1, 0
        %vm411 = vcmp.eq.s32.totalorder %v410, 1
        %v412 = vsel %vm411, %v409, 0.0
        %414 = vset.pattern.permute.xlu0 0
        %415 = vperm.xlu0 %414, %v405
        %v416 = vpop.permute.xlu0 %415
        %v418 = vsub.f32 %v402, %v416
        %v419 = vmul.f32 %v418, %v418
        %v420 = vsel %vm411, %v419, 0.0
        %422 = vset.pattern.permute.xlu0 0
        %423 = vperm.xlu0 %422, %v406
        %v424 = vpop.permute.xlu0 %423
        %427 = vset.pattern.permute.xlu0 0
        %428 = vperm.xlu0 %427, %v407
        %v429 = vpop.permute.xlu0 %428
        %v431 = vsub.f32 %v403, %v424
        %v432 = vsub.f32 %v404, %v429
        %v433 = vmul.f32 %v431, %v431
        %v434 = vmul.f32 %v432, %v432
        %v435 = vsel %vm411, %v433, 0.0
        %v436 = vsel %vm411, %v434, 0.0
        %vm437 = vcmp.lt.f32.partialorder %v401, 0.0
        %vm438 = vmand %vm411, %vm437
        %v439 = vsel %vm438, 1.0, 0.0
        %vm440 = vcmp.lt.f32.partialorder %v403, 0.0
        %vm441 = vcmp.lt.f32.partialorder %v404, 0.0
        %vm442 = vmand %vm411, %vm440
        %vm443 = vmand %vm411, %vm441
        %v444 = vsel %vm442, 1.0, 0.0
        %v445 = vsel %vm443, 1.0, 0.0
        %v446 = vld [vmem:[#allocation2] sm:$0x7f]
        %v447 = vadd.f32 %v446, %v412
        %448 = vst [vmem:[#allocation2] sm:$0x7f] %v447
        %v449 = vld [vmem:[#allocation3] sm:$0x7f]
        %v450 = vadd.f32 %v449, %v420
        %451 = vst [vmem:[#allocation3] sm:$0x7f] %v450
        %v452 = vld [vmem:[#allocation4] sm:$0xff]
        %v453 = vld [vmem:[#allocation4 + $0x8] sm:$0x3]
        %v454 = vadd.f32 %v452, %v435
        %v455 = vadd.f32 %v453, %v436
        %456 = vst [vmem:[#allocation4] sm:$0xff] %v454
        %457 = vst [vmem:[#allocation4 + $0x8] sm:$0x3] %v455
        %v458 = vld [vmem:[#allocation5] sm:$0x7f]
        %v459 = vadd.f32 %v458, %v439
        %460 = vst [vmem:[#allocation5] sm:$0x7f] %v459
        %v461 = vld [vmem:[#allocation6] sm:$0xff]
        %v462 = vld [vmem:[#allocation6 + $0x8] sm:$0x3]
        %v463 = vadd.f32 %v461, %v444
        %v464 = vadd.f32 %v462, %v445
        %465 = vst [vmem:[#allocation6] sm:$0xff] %v463
        %466 = vst [vmem:[#allocation6 + $0x8] sm:$0x3] %v464
        %p467 = scmp.eq.s32.totalorder %s25, 1
        // Predicated region
        $region95: #{tpu_custom_call.1} parent=81 // pred_check
          %p468 = pneg %p467
        $region96: #{tpu_custom_call.1} parent=81 // pred_check_branch
          %470 = sbr.rel (%p468) target = $region98
        $region97: #{tpu_custom_call.1} parent=81 // pred_region
          %v471 = vld [vmem:[#allocation2] sm:$0x7f]
          %vm472 = vcmask 1046528
          %v473 = vsel %vm472, %v471, 0.0
          %474 = vadd.xlane.f32.xlu0 %v473
          %v475 = vpop.xlane.xlu0 %474
          %v476 = vld [vmem:[#allocation3] sm:$0x7f]
          %v477 = vsel %vm472, %v476, 0.0
          %478 = vadd.xlane.f32.xlu0 %v477
          %v479 = vpop.xlane.xlu0 %478
          %v480 = vld [vmem:[#allocation4] sm:$0xff]
          %v481 = vld [vmem:[#allocation4 + $0x8] sm:$0x3]
          %482 = vadd.xlane.f32.xlu0 %v480
          %v483 = vpop.xlane.xlu0 %482
          %vm484 = vcmask 1041408
          %v485 = vsel %vm484, %v481, 0.0
          %486 = vadd.xlane.f32.xlu0 %v485
          %v487 = vpop.xlane.xlu0 %486
          %v488 = vld [vmem:[#allocation5] sm:$0x7f]
          %v489 = vsel %vm472, %v488, 0.0
          %490 = vadd.xlane.f32.xlu0 %v489
          %v491 = vpop.xlane.xlu0 %490
          %v492 = vrot.slane %v491, 4
          %v493 = vadd.f32 %v491, %v492
          %v494 = vrot.slane %v493, 2
          %v495 = vadd.f32 %v493, %v494
          %v496 = vrot.slane %v495, 1
          %v497 = vadd.f32 %v495, %v496
          %s498 = vtos %v497
          %v499 = vld [vmem:[#allocation6] sm:$0xff]
          %v500 = vld [vmem:[#allocation6 + $0x8] sm:$0x3]
          %v501 = vsel %vm484, %v500, 0.0
          %v502 = vadd.f32 %v499, %v501
          %503 = vadd.xlane.f32.xlu0 %v502
          %v504 = vpop.xlane.xlu0 %503
          %v505 = vrot.slane %v504, 4
          %v506 = vadd.f32 %v504, %v505
          %v507 = vrot.slane %v506, 2
          %v508 = vadd.f32 %v506, %v507
          %v509 = vrot.slane %v508, 1
          %v510 = vadd.f32 %v508, %v509
          %s511 = vtos %v510
          %s512 = sadd.f32 %s498, %s511
          %v513 = vmul.f32 %v475, 0.005
          %v514 = vrsqrt.pop %v513
          %v515 = vmul.f32 %v513, %v514
          %vm516 = vcmp.eq.f32.partialorder %v513, inf
          %v517 = vsel %vm516, %v513, %v515
          %vm518 = vcmp.eq.f32.partialorder %v513, 0.0
          %v519 = vand.u32 %v513, 2147483648
          %v520 = vsel %vm518, %v519, %v517
          %v521 = vmul.f32 %v483, 0.005
          %v522 = vmul.f32 %v487, 0.005
          %v523 = vrsqrt.pop %v521
          %v524 = vmul.f32 %v521, %v523
          %vm525 = vcmp.eq.f32.partialorder %v521, inf
          %v526 = vsel %vm525, %v521, %v524
          %vm527 = vcmp.eq.f32.partialorder %v521, 0.0
          %v528 = vand.u32 %v521, 2147483648
          %v529 = vsel %vm527, %v528, %v526
          %v530 = vrsqrt.pop %v522
          %v531 = vmul.f32 %v522, %v530
          %vm532 = vcmp.eq.f32.partialorder %v522, inf
          %v533 = vsel %vm532, %v522, %v531
          %vm534 = vcmp.eq.f32.partialorder %v522, 0.0
          %v535 = vand.u32 %v522, 2147483648
          %v536 = vsel %vm534, %v535, %v533
          %v537 = vld [vmem:[%s5] sm:$0x7f]
          %v538 = vld [vmem:[%s6] sm:$0xff]
          %v539 = vld [vmem:[%s6 + $0x8] sm:$0x3]
          %v540 = vmul.f32 %v520, %v537
          %vm541 = vcmask 6144
          %v542 = vsel %vm541, %v540, 0.0
          %543 = vadd.xlane.f32.xlu0 %v542
          %v544 = vpop.xlane.xlu0 %543
          %v545 = vrot.slane %v544, 4
          %v546 = vadd.f32 %v544, %v545
          %v547 = vrot.slane %v546, 2
          %v548 = vadd.f32 %v546, %v547
          %v549 = vrot.slane %v548, 1
          %v550 = vadd.f32 %v548, %v549
          %s551 = vtos %v550
          %v552 = vsel %vm541, %v537, 0.0
          %553 = vadd.xlane.f32.xlu0 %v552
          %v554 = vpop.xlane.xlu0 %553
          %v555 = vrot.slane %v554, 4
          %v556 = vadd.f32 %v554, %v555
          %v557 = vrot.slane %v556, 2
          %v558 = vadd.f32 %v556, %v557
          %v559 = vrot.slane %v558, 1
          %v560 = vadd.f32 %v558, %v559
          %s561 = vtos %v560
          %v562 = vstv %s561
          %v563 = vrcp.pop %v562
          %s564 = vtos %v563
          %s565 = smul.f32 %s551, %s564
          %v566 = vmul.f32 %v529, %v538
          %v567 = vmul.f32 %v536, %v539
          %vm568 = vcmask 7168
          %v569 = vsel %vm568, %v566, 0.0
          %vm570 = vcmask 1024
          %v571 = vsel %vm570, %v567, 0.0
          %v572 = vadd.f32 %v569, %v571
          %573 = vadd.xlane.f32.xlu0 %v572
          %v574 = vpop.xlane.xlu0 %573
          %v575 = vrot.slane %v574, 4
          %v576 = vadd.f32 %v574, %v575
          %v577 = vrot.slane %v576, 2
          %v578 = vadd.f32 %v576, %v577
          %v579 = vrot.slane %v578, 1
          %v580 = vadd.f32 %v578, %v579
          %s581 = vtos %v580
          %v582 = vsel %vm568, %v538, 0.0
          %v583 = vsel %vm570, %v539, 0.0
          %v584 = vadd.f32 %v582, %v583
          %585 = vadd.xlane.f32.xlu0 %v584
          %v586 = vpop.xlane.xlu0 %585
          %v587 = vrot.slane %v586, 4
          %v588 = vadd.f32 %v586, %v587
          %v589 = vrot.slane %v588, 2
          %v590 = vadd.f32 %v588, %v589
          %v591 = vrot.slane %v590, 1
          %v592 = vadd.f32 %v590, %v591
          %s593 = vtos %v592
          %v594 = vstv %s593
          %v595 = vrcp.pop %v594
          %s596 = vtos %v595
          %s597 = smul.f32 %s581, %s596
          %v598 = vadd.f32 %v479, 1e-08
          %v599 = vrcp.pop %v598
          %v600 = vmul.f32 %v475, %v599
          %v601 = vsub.f32 1.0, %v600
          %v602 = vsel %vm541, %v601, 0.0
          %603 = vadd.xlane.f32.xlu0 %v602
          %v604 = vpop.xlane.xlu0 %603
          %v605 = vrot.slane %v604, 4
          %v606 = vadd.f32 %v604, %v605
          %v607 = vrot.slane %v606, 2
          %v608 = vadd.f32 %v606, %v607
          %v609 = vrot.slane %v608, 1
          %v610 = vadd.f32 %v608, %v609
          %s611 = vtos %v610
          %v612 = vrcp.pop 7.0
          %s613 = vtos %v612
          %s614 = smul.f32 %s611, %s613
          %s615 = smul.f32 %s512, 1.609438
          %v616 = vstv %s615
          %v617 = vmul.f32 %v616, 1.442695
          %v618 = vpow.pop %v617
          %s619 = vtos %v618
          %s620 = sadd.f32 %s619, %s565
          %v621 = vrcp.pop 25.0
          %s622 = vtos %v621
          %s623 = smul.f32 %s597, %s622
          %s624 = sadd.f32 %s620, %s623
          %v625 = vstv %s624
          %vm626 = vcmask 0
          %627 = vst.msk [vmem:[#allocation11] sm:$0x1] %vm626, %v625
          %v628 = vstv %s614
          %629 = vst.msk [vmem:[#allocation12] sm:$0x1] %vm626, %v628
        $region98: #{tpu_custom_call.1} parent=81 // pred_fallthru
          _
        // Predicated region
        $region99: #{tpu_custom_call.1} parent=81 // pred_check
          %p630 = pneg %p200
        $region100: #{tpu_custom_call.1} parent=81 // pred_check_branch
          %632 = sbr.rel (%p630) target = $region102
        $region101: #{tpu_custom_call.1} parent=81 // pred_region
          %s634 = ssub.s32 16, 16
          %635 = vsyncadd [#allocation9], %s634
          %s637 = sshll.u32 [#allocation11], 4
          %s638 = int_to_ptr.vmem [resolvable:$true] %s637
          %640 = dma.vmem_to_hbm [thread:$0]  %s638, 16, %s7, [#allocation9]
        $region102: #{tpu_custom_call.1} parent=81 // pred_fallthru
          _
        // Predicated region
        $region103: #{tpu_custom_call.1} parent=81 // pred_check
          %p641 = pneg %p221
        $region104: #{tpu_custom_call.1} parent=81 // pred_check_branch
          %643 = sbr.rel (%p641) target = $region106
        $region105: #{tpu_custom_call.1} parent=81 // pred_region
          %s645 = ssub.s32 16, 16
          %646 = vsyncadd [#allocation13], %s645
          %s648 = sshll.u32 [#allocation12], 4
          %s649 = int_to_ptr.vmem [resolvable:$true] %s648
          %651 = dma.vmem_to_hbm [thread:$0]  %s649, 16, %s8, [#allocation13]
        $region106: #{tpu_custom_call.1} parent=81 // pred_fallthru
          _
        // Predicated region
        $region107: #{tpu_custom_call.1} parent=81 // pred_check
          %p652 = pneg %p200
        $region108: #{tpu_custom_call.1} parent=81 // pred_check_branch
          %654 = sbr.rel (%p652) target = $region110
        $region109: #{tpu_custom_call.1} parent=81 // pred_region
          %655 = dma.done [#allocation9], 16
        $region110: #{tpu_custom_call.1} parent=81 // pred_fallthru
          _
        // Predicated region
        $region111: #{tpu_custom_call.1} parent=81 // pred_check
          %p656 = pneg %p221
        $region112: #{tpu_custom_call.1} parent=81 // pred_check_branch
          %658 = sbr.rel (%p656) target = $region114
        $region113: #{tpu_custom_call.1} parent=81 // pred_region
          %659 = dma.done [#allocation13], 16
        $region114: #{tpu_custom_call.1} parent=81 // pred_fallthru
          _
      $region82: #{tpu_custom_call.1} parent=5 // pred_fallthru
        _
      %p660 = scmp.le.s32.totalorder 2, %s20
      // Predicated region
      $region115: #{tpu_custom_call.1} parent=5 // pred_check
        %p661 = pneg %p660
      $region116: #{tpu_custom_call.1} parent=5 // pred_check_branch
        %663 = sbr.rel (%p661) target = $region118
      $region117: #{tpu_custom_call.1} parent=5 // pred_region
        %s664 = ssub.s32 %s20, 2
      $region118: #{tpu_custom_call.1} parent=5 // pred_fallthru
        _
    $region6: #{tpu_custom_call.1} parent=1 // loop_footer
      %s24 = sadd.s32 1, %s20
    $region7: #{tpu_custom_call.1} parent=1 // loop_footer_branch
      %19 = sbr.rel target = $region3
    $region8: #{tpu_custom_call.1} parent=1 // loop_exit
      _
    %665 = vsyncpa [#allocation8], 1
    %s666 = scalar_lea.sflag [#allocation8], 1
    %667 = vsyncpa %s666, 1
    %668 = vsyncpa [#allocation9], 1
    %s669 = scalar_lea.sflag [#allocation9], 1
    %670 = vsyncpa %s669, 1
    %671 = vsyncpa [#allocation13], 1

</llo_original>
